<compile_context>
chip_gen: v7x
topology: tpu7x:2x2x1
jax: 0.10.0
libtpu: 0.0.40
codegen_flags: <defaults>
</compile_context>

<pallas_src>
import functools

import jax
import jax.numpy as jnp
from jax.experimental import pallas as pl
from jax.experimental.pallas import tpu as pltpu

_LANES = 128


def _heaviside_kernel(x_ref, o_ref, *, thresh):
    # Compare in the input's native dtype (thresh=1.0 is exact in bf16/f16),
    # then cast the bool straight to the output dtype. One cmp + one select
    # per vreg on the VPU — invisible next to the HBM DMA.
    t = jnp.asarray(thresh, dtype=x_ref.dtype)
    o_ref[...] = (x_ref[...] > t).astype(o_ref.dtype)


def _row_cap() -> int:
    """Per-generation tile-row cap (block = (cap, 128), in + out, double-buffered)."""
    try:
        kind = jax.devices()[0].device_kind.lower()
    except Exception:
        return 4096
    # v5e: 16 MiB scoped-VMEM default -> 4096x128 f32 in+out dbl-buffered = 8 MiB.
    if "v5" in kind:
        return 4096
    # v6e / v7x: 32 MiB scoped default -> 8192x128 f32 in+out dbl-buffered = 16 MiB.
    return 8192


def _pick_tile_rows(rows: int, cap: int) -> int:
    if rows <= 64:
        # Tiny forced-kernel path (tests / debugging): one block == full array
        # (always a legal block shape).
        return rows
    # Aim for >= 2 grid steps so v7x's two TensorCores both stream, while
    # staying under the per-chip VMEM cap. Multiple of 32 rows is layout-safe
    # for f32 / bf16 / int8 inputs.
    tr = min(cap, -(-rows // 2))
    return max(32, (tr // 32) * 32)


def heaviside_boxcar(x: jax.Array, thresh: float = 1.0, subthresh: float = 0.5,
                     *, out_dtype=jnp.float32, tile_rows: int | None = None,
                     min_pallas_elems: int = 1 << 20) -> jax.Array:
    """Forward of HeavisideBoxcarCall(spiking=True): (x > thresh) cast to out_dtype.

    `subthresh` only shapes the autograd backward (boxcar surrogate) in the
    PyTorch module; it does not affect the forward and is accepted for parity.
    `out_dtype` defaults to float32 (PyTorch `.float()` parity); bf16 is exact
    for the {0,1} spike tensor and ~25-50% cheaper in HBM writeback.
    """
    del subthresh  # forward-only; boxcar surrogate is backward/autograd-only.
    orig_shape = x.shape
    n = x.size
    thresh = float(thresh)

    if n == 0:
        return jnp.zeros(orig_shape, out_dtype)

    def _xla_cmp(v):
        return (v > jnp.asarray(thresh, v.dtype)).astype(out_dtype)

    # Small-input fast path: pallas_call launch + pipeline prologue/epilogue
    # dominates for tiny SNN layers; let XLA fuse the compare instead.
    if n < min_pallas_elems:
        return _xla_cmp(x)

    x_flat = x.reshape(-1)
    rem = n % _LANES
    n_main = n - rem
    if n_main == 0:
        # Fewer than 128 elements total: nothing for the kernel to do.
        return _xla_cmp(x)

    rows = n_main // _LANES
    cap = _row_cap()
    tr = tile_rows if tile_rows is not None else _pick_tile_rows(rows, cap)

    # Aligned prefix as a lane-dense (rows, 128) slab in the native dtype.
    # rem == 0 (typical SNN feature dims) -> this reshape is copy-free.
    x_main = x_flat if rem == 0 else x_flat[:n_main]
    x2d = x_main.reshape(rows, _LANES)

    grid = (pl.cdiv(rows, tr),)  # ragged last block: OOB writes are masked
    kernel = functools.partial(_heaviside_kernel, thresh=thresh)

    out2d = pl.pallas_call(
        kernel,
        out_shape=jax.ShapeDtypeStruct((rows, _LANES), out_dtype),
        grid=grid,
        in_specs=[pl.BlockSpec((tr, _LANES), lambda i: (i, 0))],
        out_specs=pl.BlockSpec((tr, _LANES), lambda i: (i, 0)),
        compiler_params=pltpu.CompilerParams(
            dimension_semantics=("parallel",)),
    )(x2d)

    if rem == 0:
        return out2d.reshape(orig_shape)

    # Rare non-aligned path: <128-element tail via a tiny XLA compare, then one
    # output-sized concat (still cheaper than full-array pad + post-slice).
    tail = _xla_cmp(x_flat[n_main:])
    return jnp.concatenate([out2d.reshape(-1), tail]).reshape(orig_shape)


if __name__ == "__main__":
    key = jax.random.PRNGKey(0)
    k1, k2, k3 = jax.random.split(key, 3)

    def ref(x, thresh=1.0, out_dtype=jnp.float32):
        # Compare in the input's native dtype, like the kernel.
        return (x > jnp.asarray(thresh, x.dtype)).astype(out_dtype)

    # 1) canonical SNN membrane-potential tensor (NCHW), f32, forced kernel path
    #    (includes an exact-threshold element to check strict '>').
    x1 = jax.random.normal(k1, (2, 4, 16, 16), dtype=jnp.float32) * 2.0
    x1 = x1.at[0, 0, 0, 0].set(1.0)
    y1 = jax.block_until_ready(heaviside_boxcar(x1, min_pallas_elems=0))
    assert y1.shape == x1.shape and y1.dtype == jnp.float32
    assert bool(jnp.all(y1 == ref(x1)))
    assert float(y1[0, 0, 0, 0]) == 0.0  # x == thresh -> no spike

    # 2) bf16 input: no wrapper upcast, compare happens in bf16 inside the kernel.
    x2 = (jax.random.normal(k2, (2, 4, 16, 16), dtype=jnp.float32) * 2.0
          ).astype(jnp.bfloat16)
    y2 = jax.block_until_ready(heaviside_boxcar(x2, min_pallas_elems=0))
    assert y2.shape == x2.shape and y2.dtype == jnp.float32
    assert bool(jnp.all(y2 == ref(x2)))

    # 3) non-128-multiple element count: aligned-prefix kernel + tiny XLA tail.
    x3 = jax.random.normal(k3, (3, 5, 7, 11), dtype=jnp.float32) * 2.0
    y3 = jax.block_until_ready(heaviside_boxcar(x3, min_pallas_elems=0))
    assert y3.shape == x3.shape and y3.dtype == jnp.float32
    assert bool(jnp.all(y3 == ref(x3)))

    # 4) narrow (bf16) spike output: exact for {0,1}, half the writeback bytes.
    y4 = jax.block_until_ready(
        heaviside_boxcar(x1, out_dtype=jnp.bfloat16, min_pallas_elems=0))
    assert y4.dtype == jnp.bfloat16
    assert bool(jnp.all(y4.astype(jnp.float32) == ref(x1)))

    # 5) default small-input fast path (plain JAX) stays consistent.
    y5 = jax.block_until_ready(heaviside_boxcar(x1))
    assert bool(jnp.all(y5 == ref(x1)))

    print("KERNEL_OK")
</pallas_src>

<mosaic_0001>
module attributes {stable_mosaic.version = 11 : i64} {
  func.func @_heaviside_kernel(%arg0: i32, %arg1: memref<16x128xf32, #tpu.memory_space<vmem>>, %arg2: memref<16x128xf32, #tpu.memory_space<vmem>>) attributes {dimension_semantics = [#tpu.dimension_semantics<parallel>], iteration_bounds = array<i64: 1>, scalar_prefetch = 0 : i64, scratch_operands = 0 : i64, tpu.core_type = #tpu.core_type<tc>, window_params = [{transform_indices = @transform_0, window_bounds = array<i64: 16, 128>}, {transform_indices = @transform_1, window_bounds = array<i64: 16, 128>}]} {
    %c0 = arith.constant 0 : index
    %c0_0 = arith.constant 0 : index
    %0 = vector.load %arg1[%c0, %c0_0] : memref<16x128xf32, #tpu.memory_space<vmem>>, vector<16x128xf32>
    %cst = arith.constant 1.000000e+00 : f32
    %1 = vector.broadcast %cst : f32 to vector<16x128xf32>
    %2 = arith.cmpf ogt, %0, %1 : vector<16x128xf32>
    %3 = arith.extui %2 : vector<16x128xi1> to vector<16x128xi32>
    %4 = arith.sitofp %3 : vector<16x128xi32> to vector<16x128xf32>
    %c0_1 = arith.constant 0 : index
    %c0_2 = arith.constant 0 : index
    %5 = vector.load %arg2[%c0_1, %c0_2] : memref<16x128xf32, #tpu.memory_space<vmem>>, vector<16x128xf32>
    tpu.vector_store %arg2[%c0_1, %c0_2], %4 {strides = array<i32>} : memref<16x128xf32, #tpu.memory_space<vmem>>, vector<16x128xf32>,
    return
  }
  func.func @transform_0(%arg0: i32) -> (i32, i32) {
    %c0_i32 = arith.constant 0 : i32
    %c0_i32_0 = arith.constant 0 : i32
    return %arg0, %c0_i32 : i32, i32
  }
  func.func @transform_1(%arg0: i32) -> (i32, i32) {
    %c0_i32 = arith.constant 0 : i32
    %c0_i32_0 = arith.constant 0 : i32
    return %arg0, %c0_i32 : i32, i32
  }
}

</mosaic_0001>

<llo_original>
// kernel: tpu_custom_call.1
$region0: #{tpu_custom_call.1}
  #allocation0 [shape = 'u32[]', space=smem, size = 0x4, offset = 0x4, fixed_abs, tag = 'smem constant byte address 0x4 - core index']
  #allocation1 [shape = 'u32[144,128]{1,0:T(1,128)}', space=vmem, size = 0x12000, scoped, tag = 'internal scratch']
  %s0 = inlined_call_operand.hbm [shape: f32[16,128], index: 0, kind: input, shape index: {}]
  %s1 = inlined_call_operand.hbm [shape: f32[16,128], index: 1, kind: output, shape index: {}]
  %s2 = sld [smem:[#allocation0]]
  $region18: #{tpu_custom_call.1} parent=0
    _
  %s4 = ssub.s32 1, %s2
  %s5 = scalar_select 0, %s4, %s2
  $region1: #{tpu_custom_call.1} parent=0
    #allocation2 [shape = 'u8[8192]{0}', space=vmem, size = 0x2000, scoped, tag = 'input window, operand 0, single buffered']
    #allocation3 [shape = 's32[1]{0}', space=sflag, size = 0x4, scoped, tag = 'scoped memory for tpu_custom_call.1']
    #allocation4 [shape = 's32[1]{0}', space=sflag, size = 0x4, scoped, tag = 'scoped memory for tpu_custom_call.1']
    #allocation5 [shape = 'u8[8192]{0}', space=vmem, size = 0x2000, scoped, tag = 'output window, operand 0, single buffered']
    %6 = vsyncpa [#allocation3], 0
    %7 = vsyncpa [#allocation4], 0
    // Predicated region
    $region2: #{tpu_custom_call.1} parent=1 // pred_check
      _
    $region3: #{tpu_custom_call.1} parent=1 // pred_check_branch
      %9 = sbr.rel (0) target = $region5
    $region4: #{tpu_custom_call.1} parent=1 // pred_region
      %s11 = ssub.s32 256, 256
      %12 = vsyncadd [#allocation3], %s11
      %s13 = sshll.u32 [#allocation2], 4
      %s14 = int_to_ptr.vmem [resolvable:$true] %s13
      %19 = dma.hbm_to_vmem [thread:$0]  %s0, 256, %s14, [#allocation3], 128, 128, 8
    $region5: #{tpu_custom_call.1} parent=1 // pred_fallthru
      _
    // Predicated region
    $region6: #{tpu_custom_call.1} parent=1 // pred_check
      _
    $region7: #{tpu_custom_call.1} parent=1 // pred_check_branch
      %21 = sbr.rel (0) target = $region9
    $region8: #{tpu_custom_call.1} parent=1 // pred_region
      %22 = dma.done [#allocation3], 256
    $region9: #{tpu_custom_call.1} parent=1 // pred_fallthru
      _
    %v23 = vld [vmem:[#allocation2] sm:$0xff]
    %v24 = vld [vmem:[#allocation2 + $0x8] sm:$0xff]
    %vm25 = vcmp.gt.f32.partialorder %v23, 1.0
    %vm26 = vcmp.gt.f32.partialorder %v24, 1.0
    %v27 = vsel %vm25, 1, 0
    %v28 = vsel %vm26, 1, 0
    %v29 = vcvt.s32.f32 %v27
    %v30 = vcvt.s32.f32 %v28
    %31 = vst [vmem:[#allocation5] sm:$0xff] %v29
    %32 = vst [vmem:[#allocation5 + $0x8] sm:$0xff] %v30
    // Predicated region
    $region10: #{tpu_custom_call.1} parent=1 // pred_check
      _
    $region11: #{tpu_custom_call.1} parent=1 // pred_check_branch
      %34 = sbr.rel (0) target = $region13
    $region12: #{tpu_custom_call.1} parent=1 // pred_region
      %s36 = ssub.s32 256, 256
      %37 = vsyncadd [#allocation4], %s36
      %s38 = sshll.u32 [#allocation5], 4
      %s39 = int_to_ptr.vmem [resolvable:$true] %s38
      %44 = dma.vmem_to_hbm [thread:$0]  %s39, 256, %s1, [#allocation4], 128, 128, 8
    $region13: #{tpu_custom_call.1} parent=1 // pred_fallthru
      _
    // Predicated region
    $region14: #{tpu_custom_call.1} parent=1 // pred_check
      _
    $region15: #{tpu_custom_call.1} parent=1 // pred_check_branch
      %46 = sbr.rel (0) target = $region17
    $region16: #{tpu_custom_call.1} parent=1 // pred_region
      %47 = dma.done [#allocation4], 256
    $region17: #{tpu_custom_call.1} parent=1 // pred_fallthru
      _
    %48 = vsyncpa [#allocation3], 1
    %49 = vsyncpa [#allocation4], 1

</llo_original>
